<compile_context>
chip_gen: v7x
topology: tpu7x:2x2x1
jax: 0.10.0
libtpu: 0.0.40
codegen_flags: <defaults>
</compile_context>

<pallas_src>
import jax
import jax.numpy as jnp
from jax.experimental import pallas as pl
from jax.experimental.pallas import tpu as pltpu

HIDDEN = 9      # matches the PyTorch module
LANE = 128      # TPU lane width — batch is padded to a multiple of this
MAX_TB = 4096   # max batch columns per grid step (VMEM use is tiny either way)


def _net_kernel(xT_ref, w1_ref, b1_ref, w2_ref, b2_ref, outT_ref):
    """Batch-on-lanes forward pass of fc2(relu(fc1(x))).

    xT_ref  : (obs_dim, TB)        VMEM f32  — batch along lanes
    w1_ref  : (obs_dim * HIDDEN,)  SMEM f32  — row-major [k * HIDDEN + j]
    b1_ref  : (HIDDEN,)            SMEM f32
    w2_ref  : (HIDDEN * act_dim,)  SMEM f32  — row-major [j * act_dim + a]
    b2_ref  : (act_dim,)           SMEM f32
    outT_ref: (act_dim, TB)        VMEM f32  — batch along lanes (lane-dense)
    """
    obs_dim = xT_ref.shape[0]
    act_dim = outT_ref.shape[0]
    hidden = b1_ref.shape[0]

    x = xT_ref[...]                                        # (obs_dim, TB)
    x_rows = [x[k:k + 1, :] for k in range(obs_dim)]       # hoisted (1, TB) rows

    # Fused fc1 -> relu -> fc2: SMEM scalars splat over lanes (no cross-lane
    # broadcasts), hidden activations never materialized.
    out_rows = [None] * act_dim
    for j in range(hidden):
        hj = x_rows[0] * w1_ref[0 * hidden + j]
        for k in range(1, obs_dim):
            hj = hj + x_rows[k] * w1_ref[k * hidden + j]
        hj = jnp.maximum(hj + b1_ref[j], 0.0)              # (1, TB)
        for a in range(act_dim):
            t = hj * w2_ref[j * act_dim + a]
            out_rows[a] = t if out_rows[a] is None else out_rows[a] + t

    for a in range(act_dim):
        outT_ref[a:a + 1, :] = out_rows[a] + b2_ref[a]


def prepare_params(w1, b1, w2, b2):
    """One-time parameter prep (hoisted out of the per-step path).

    w1: (obs_dim, HIDDEN), b1: (HIDDEN,), w2: (HIDDEN, act_dim), b2: (act_dim,)
    Returns flattened f32 arrays destined for SMEM.
    """
    w1 = jnp.asarray(w1, jnp.float32)
    w2 = jnp.asarray(w2, jnp.float32)
    obs_dim, hidden = w1.shape
    hidden2, act_dim = w2.shape
    assert hidden == hidden2
    return (
        jnp.reshape(w1, (obs_dim * hidden,)),
        jnp.asarray(b1, jnp.float32).reshape((hidden,)),
        jnp.reshape(w2, (hidden * act_dim,)),
        jnp.asarray(b2, jnp.float32).reshape((act_dim,)),
    )


def net_forward(x, params, *, max_block_cols=MAX_TB):
    """Forward pass of Net: fc2(relu(fc1(x))).  x: (B, obs_dim) f32."""
    w1f, b1, w2f, b2 = params
    B, obs_dim = x.shape
    hidden = b1.shape[0]
    act_dim = b2.shape[0]
    assert w1f.shape[0] == obs_dim * hidden and w2f.shape[0] == hidden * act_dim

    # Batch tiling: lane-pad the batch, then pick large tiles (amortize the
    # per-grid-step overhead) while guaranteeing >=2 tiles whenever the batch
    # is non-trivial so v7x can shard the "parallel" axis across both TCs.
    b_lane = ((B + LANE - 1) // LANE) * LANE
    if b_lane <= LANE:
        tb = LANE
    else:
        n_tiles = max(2, pl.cdiv(b_lane, max_block_cols))
        tb = ((pl.cdiv(b_lane, n_tiles) + LANE - 1) // LANE) * LANE
    n_tiles = pl.cdiv(b_lane, tb)
    b_pad = n_tiles * tb

    # Layout plumbing: batch-on-lanes view of x (obs_dim rows, B_pad columns).
    xT = jnp.pad(x.astype(jnp.float32).T, ((0, 0), (0, b_pad - B)))

    outT = pl.pallas_call(
        _net_kernel,
        out_shape=jax.ShapeDtypeStruct((act_dim, b_pad), jnp.float32),
        grid=(n_tiles,),
        in_specs=[
            pl.BlockSpec((obs_dim, tb), lambda i: (0, i)),        # x, tiled over batch
            pl.BlockSpec(memory_space=pltpu.MemorySpace.SMEM),    # w1 scalars
            pl.BlockSpec(memory_space=pltpu.MemorySpace.SMEM),    # b1 scalars
            pl.BlockSpec(memory_space=pltpu.MemorySpace.SMEM),    # w2 scalars
            pl.BlockSpec(memory_space=pltpu.MemorySpace.SMEM),    # b2 scalars
        ],
        out_specs=pl.BlockSpec((act_dim, tb), lambda i: (0, i)),  # lane-dense output
        compiler_params=pltpu.CompilerParams(
            dimension_semantics=("parallel",),   # shard batch tiles over TCs on v7x
        ),
    )(xT, w1f, b1, w2f, b2)

    return outT[:, :B].T   # (B, act_dim)


def init_params(key, obs_dim, act_dim):
    """Deterministic init matching PyTorch nn.Linear default:
    U(-1/sqrt(fan_in), 1/sqrt(fan_in)) for both weight and bias."""
    k1, k2, k3, k4 = jax.random.split(key, 4)
    bound1 = 1.0 / jnp.sqrt(obs_dim)
    bound2 = 1.0 / jnp.sqrt(HIDDEN)
    # stored as (in_features, out_features), i.e. transpose of torch's (out, in)
    w1 = jax.random.uniform(k1, (obs_dim, HIDDEN), jnp.float32, -bound1, bound1)
    b1 = jax.random.uniform(k2, (HIDDEN,), jnp.float32, -bound1, bound1)
    w2 = jax.random.uniform(k3, (HIDDEN, act_dim), jnp.float32, -bound2, bound2)
    b2 = jax.random.uniform(k4, (act_dim,), jnp.float32, -bound2, bound2)
    return w1, b1, w2, b2


if __name__ == "__main__":
    obs_dim, act_dim = 4, 2   # CartPole-like dims

    key = jax.random.PRNGKey(0)
    kx, kp, kx2 = jax.random.split(key, 3)
    w1, b1, w2, b2 = init_params(kp, obs_dim, act_dim)
    params = prepare_params(w1, b1, w2, b2)   # one-time prep, reused every step

    def ref_fwd(x):
        return jnp.maximum(x @ w1 + b1, 0.0) @ w2 + b2

    # small per-step batch (single tile)
    x_small = jax.random.normal(kx, (8, obs_dim), jnp.float32)
    out_small = net_forward(x_small, params)
    jax.block_until_ready(out_small)
    assert out_small.shape == (8, act_dim)
    assert jnp.allclose(out_small, ref_fwd(x_small), atol=1e-5, rtol=1e-5)

    # rollout-style batch exercising the multi-tile grid + batch padding path
    x_big = jax.random.normal(kx2, (1000, obs_dim), jnp.float32)
    out_big = net_forward(x_big, params)
    jax.block_until_ready(out_big)
    assert out_big.shape == (1000, act_dim)
    assert jnp.allclose(out_big, ref_fwd(x_big), atol=1e-4, rtol=1e-4)

    print("KERNEL_OK")
</pallas_src>

<mosaic_0001>
module attributes {stable_mosaic.version = 11 : i64} {
  func.func @_net_kernel(%arg0: i32, %arg1: memref<4x128xf32, #tpu.memory_space<vmem>>, %arg2: memref<36xf32, #tpu.memory_space<smem>>, %arg3: memref<9xf32, #tpu.memory_space<smem>>, %arg4: memref<18xf32, #tpu.memory_space<smem>>, %arg5: memref<2xf32, #tpu.memory_space<smem>>, %arg6: memref<2x128xf32, #tpu.memory_space<vmem>>) attributes {dimension_semantics = [#tpu.dimension_semantics<parallel>], iteration_bounds = array<i64: 1>, scalar_prefetch = 0 : i64, scratch_operands = 0 : i64, tpu.core_type = #tpu.core_type<tc>, window_params = [{transform_indices = @transform_0, window_bounds = array<i64: 4, 128>}, {transform_indices = @transform_1, window_bounds = array<i64: 36>}, {transform_indices = @transform_2, window_bounds = array<i64: 9>}, {transform_indices = @transform_3, window_bounds = array<i64: 18>}, {transform_indices = @transform_4, window_bounds = array<i64: 2>}, {transform_indices = @transform_5, window_bounds = array<i64: 2, 128>}]} {
    %c0 = arith.constant 0 : index
    %c0_0 = arith.constant 0 : index
    %0 = vector.load %arg1[%c0, %c0_0] : memref<4x128xf32, #tpu.memory_space<vmem>>, vector<4x128xf32>
    %1 = vector.extract_strided_slice %0 {offsets = [0, 0], sizes = [1, 128], strides = [1, 1]} : vector<4x128xf32> to vector<1x128xf32>
    %2 = vector.extract_strided_slice %0 {offsets = [1, 0], sizes = [1, 128], strides = [1, 1]} : vector<4x128xf32> to vector<1x128xf32>
    %3 = vector.extract_strided_slice %0 {offsets = [2, 0], sizes = [1, 128], strides = [1, 1]} : vector<4x128xf32> to vector<1x128xf32>
    %4 = vector.extract_strided_slice %0 {offsets = [3, 0], sizes = [1, 128], strides = [1, 1]} : vector<4x128xf32> to vector<1x128xf32>
    %c0_1 = arith.constant 0 : index
    %5 = memref.load %arg2[%c0_1] : memref<36xf32, #tpu.memory_space<smem>>
    %6 = vector.broadcast %5 : f32 to vector<1x128xf32>
    %7 = arith.mulf %1, %6 : vector<1x128xf32>
    %c9 = arith.constant 9 : index
    %8 = memref.load %arg2[%c9] : memref<36xf32, #tpu.memory_space<smem>>
    %9 = vector.broadcast %8 : f32 to vector<1x128xf32>
    %10 = arith.mulf %2, %9 : vector<1x128xf32>
    %11 = arith.addf %7, %10 : vector<1x128xf32>
    %c18 = arith.constant 18 : index
    %12 = memref.load %arg2[%c18] : memref<36xf32, #tpu.memory_space<smem>>
    %13 = vector.broadcast %12 : f32 to vector<1x128xf32>
    %14 = arith.mulf %3, %13 : vector<1x128xf32>
    %15 = arith.addf %11, %14 : vector<1x128xf32>
    %c27 = arith.constant 27 : index
    %16 = memref.load %arg2[%c27] : memref<36xf32, #tpu.memory_space<smem>>
    %17 = vector.broadcast %16 : f32 to vector<1x128xf32>
    %18 = arith.mulf %4, %17 : vector<1x128xf32>
    %19 = arith.addf %15, %18 : vector<1x128xf32>
    %c0_2 = arith.constant 0 : index
    %20 = memref.load %arg3[%c0_2] : memref<9xf32, #tpu.memory_space<smem>>
    %21 = vector.broadcast %20 : f32 to vector<1x128xf32>
    %22 = arith.addf %19, %21 : vector<1x128xf32>
    %cst = arith.constant 0.000000e+00 : f32
    %23 = vector.broadcast %cst : f32 to vector<1x128xf32>
    %24 = arith.maximumf %22, %23 : vector<1x128xf32>
    %c0_3 = arith.constant 0 : index
    %25 = memref.load %arg4[%c0_3] : memref<18xf32, #tpu.memory_space<smem>>
    %26 = vector.broadcast %25 : f32 to vector<1x128xf32>
    %27 = arith.mulf %24, %26 : vector<1x128xf32>
    %c1 = arith.constant 1 : index
    %28 = memref.load %arg4[%c1] : memref<18xf32, #tpu.memory_space<smem>>
    %29 = vector.broadcast %28 : f32 to vector<1x128xf32>
    %30 = arith.mulf %24, %29 : vector<1x128xf32>
    %c1_4 = arith.constant 1 : index
    %31 = memref.load %arg2[%c1_4] : memref<36xf32, #tpu.memory_space<smem>>
    %32 = vector.broadcast %31 : f32 to vector<1x128xf32>
    %33 = arith.mulf %1, %32 : vector<1x128xf32>
    %c10 = arith.constant 10 : index
    %34 = memref.load %arg2[%c10] : memref<36xf32, #tpu.memory_space<smem>>
    %35 = vector.broadcast %34 : f32 to vector<1x128xf32>
    %36 = arith.mulf %2, %35 : vector<1x128xf32>
    %37 = arith.addf %33, %36 : vector<1x128xf32>
    %c19 = arith.constant 19 : index
    %38 = memref.load %arg2[%c19] : memref<36xf32, #tpu.memory_space<smem>>
    %39 = vector.broadcast %38 : f32 to vector<1x128xf32>
    %40 = arith.mulf %3, %39 : vector<1x128xf32>
    %41 = arith.addf %37, %40 : vector<1x128xf32>
    %c28 = arith.constant 28 : index
    %42 = memref.load %arg2[%c28] : memref<36xf32, #tpu.memory_space<smem>>
    %43 = vector.broadcast %42 : f32 to vector<1x128xf32>
    %44 = arith.mulf %4, %43 : vector<1x128xf32>
    %45 = arith.addf %41, %44 : vector<1x128xf32>
    %c1_5 = arith.constant 1 : index
    %46 = memref.load %arg3[%c1_5] : memref<9xf32, #tpu.memory_space<smem>>
    %47 = vector.broadcast %46 : f32 to vector<1x128xf32>
    %48 = arith.addf %45, %47 : vector<1x128xf32>
    %cst_6 = arith.constant 0.000000e+00 : f32
    %49 = vector.broadcast %cst_6 : f32 to vector<1x128xf32>
    %50 = arith.maximumf %48, %49 : vector<1x128xf32>
    %c2 = arith.constant 2 : index
    %51 = memref.load %arg4[%c2] : memref<18xf32, #tpu.memory_space<smem>>
    %52 = vector.broadcast %51 : f32 to vector<1x128xf32>
    %53 = arith.mulf %50, %52 : vector<1x128xf32>
    %54 = arith.addf %27, %53 : vector<1x128xf32>
    %c3 = arith.constant 3 : index
    %55 = memref.load %arg4[%c3] : memref<18xf32, #tpu.memory_space<smem>>
    %56 = vector.broadcast %55 : f32 to vector<1x128xf32>
    %57 = arith.mulf %50, %56 : vector<1x128xf32>
    %58 = arith.addf %30, %57 : vector<1x128xf32>
    %c2_7 = arith.constant 2 : index
    %59 = memref.load %arg2[%c2_7] : memref<36xf32, #tpu.memory_space<smem>>
    %60 = vector.broadcast %59 : f32 to vector<1x128xf32>
    %61 = arith.mulf %1, %60 : vector<1x128xf32>
    %c11 = arith.constant 11 : index
    %62 = memref.load %arg2[%c11] : memref<36xf32, #tpu.memory_space<smem>>
    %63 = vector.broadcast %62 : f32 to vector<1x128xf32>
    %64 = arith.mulf %2, %63 : vector<1x128xf32>
    %65 = arith.addf %61, %64 : vector<1x128xf32>
    %c20 = arith.constant 20 : index
    %66 = memref.load %arg2[%c20] : memref<36xf32, #tpu.memory_space<smem>>
    %67 = vector.broadcast %66 : f32 to vector<1x128xf32>
    %68 = arith.mulf %3, %67 : vector<1x128xf32>
    %69 = arith.addf %65, %68 : vector<1x128xf32>
    %c29 = arith.constant 29 : index
    %70 = memref.load %arg2[%c29] : memref<36xf32, #tpu.memory_space<smem>>
    %71 = vector.broadcast %70 : f32 to vector<1x128xf32>
    %72 = arith.mulf %4, %71 : vector<1x128xf32>
    %73 = arith.addf %69, %72 : vector<1x128xf32>
    %c2_8 = arith.constant 2 : index
    %74 = memref.load %arg3[%c2_8] : memref<9xf32, #tpu.memory_space<smem>>
    %75 = vector.broadcast %74 : f32 to vector<1x128xf32>
    %76 = arith.addf %73, %75 : vector<1x128xf32>
    %cst_9 = arith.constant 0.000000e+00 : f32
    %77 = vector.broadcast %cst_9 : f32 to vector<1x128xf32>
    %78 = arith.maximumf %76, %77 : vector<1x128xf32>
    %c4 = arith.constant 4 : index
    %79 = memref.load %arg4[%c4] : memref<18xf32, #tpu.memory_space<smem>>
    %80 = vector.broadcast %79 : f32 to vector<1x128xf32>
    %81 = arith.mulf %78, %80 : vector<1x128xf32>
    %82 = arith.addf %54, %81 : vector<1x128xf32>
    %c5 = arith.constant 5 : index
    %83 = memref.load %arg4[%c5] : memref<18xf32, #tpu.memory_space<smem>>
    %84 = vector.broadcast %83 : f32 to vector<1x128xf32>
    %85 = arith.mulf %78, %84 : vector<1x128xf32>
    %86 = arith.addf %58, %85 : vector<1x128xf32>
    %c3_10 = arith.constant 3 : index
    %87 = memref.load %arg2[%c3_10] : memref<36xf32, #tpu.memory_space<smem>>
    %88 = vector.broadcast %87 : f32 to vector<1x128xf32>
    %89 = arith.mulf %1, %88 : vector<1x128xf32>
    %c12 = arith.constant 12 : index
    %90 = memref.load %arg2[%c12] : memref<36xf32, #tpu.memory_space<smem>>
    %91 = vector.broadcast %90 : f32 to vector<1x128xf32>
    %92 = arith.mulf %2, %91 : vector<1x128xf32>
    %93 = arith.addf %89, %92 : vector<1x128xf32>
    %c21 = arith.constant 21 : index
    %94 = memref.load %arg2[%c21] : memref<36xf32, #tpu.memory_space<smem>>
    %95 = vector.broadcast %94 : f32 to vector<1x128xf32>
    %96 = arith.mulf %3, %95 : vector<1x128xf32>
    %97 = arith.addf %93, %96 : vector<1x128xf32>
    %c30 = arith.constant 30 : index
    %98 = memref.load %arg2[%c30] : memref<36xf32, #tpu.memory_space<smem>>
    %99 = vector.broadcast %98 : f32 to vector<1x128xf32>
    %100 = arith.mulf %4, %99 : vector<1x128xf32>
    %101 = arith.addf %97, %100 : vector<1x128xf32>
    %c3_11 = arith.constant 3 : index
    %102 = memref.load %arg3[%c3_11] : memref<9xf32, #tpu.memory_space<smem>>
    %103 = vector.broadcast %102 : f32 to vector<1x128xf32>
    %104 = arith.addf %101, %103 : vector<1x128xf32>
    %cst_12 = arith.constant 0.000000e+00 : f32
    %105 = vector.broadcast %cst_12 : f32 to vector<1x128xf32>
    %106 = arith.maximumf %104, %105 : vector<1x128xf32>
    %c6 = arith.constant 6 : index
    %107 = memref.load %arg4[%c6] : memref<18xf32, #tpu.memory_space<smem>>
    %108 = vector.broadcast %107 : f32 to vector<1x128xf32>
    %109 = arith.mulf %106, %108 : vector<1x128xf32>
    %110 = arith.addf %82, %109 : vector<1x128xf32>
    %c7 = arith.constant 7 : index
    %111 = memref.load %arg4[%c7] : memref<18xf32, #tpu.memory_space<smem>>
    %112 = vector.broadcast %111 : f32 to vector<1x128xf32>
    %113 = arith.mulf %106, %112 : vector<1x128xf32>
    %114 = arith.addf %86, %113 : vector<1x128xf32>
    %c4_13 = arith.constant 4 : index
    %115 = memref.load %arg2[%c4_13] : memref<36xf32, #tpu.memory_space<smem>>
    %116 = vector.broadcast %115 : f32 to vector<1x128xf32>
    %117 = arith.mulf %1, %116 : vector<1x128xf32>
    %c13 = arith.constant 13 : index
    %118 = memref.load %arg2[%c13] : memref<36xf32, #tpu.memory_space<smem>>
    %119 = vector.broadcast %118 : f32 to vector<1x128xf32>
    %120 = arith.mulf %2, %119 : vector<1x128xf32>
    %121 = arith.addf %117, %120 : vector<1x128xf32>
    %c22 = arith.constant 22 : index
    %122 = memref.load %arg2[%c22] : memref<36xf32, #tpu.memory_space<smem>>
    %123 = vector.broadcast %122 : f32 to vector<1x128xf32>
    %124 = arith.mulf %3, %123 : vector<1x128xf32>
    %125 = arith.addf %121, %124 : vector<1x128xf32>
    %c31 = arith.constant 31 : index
    %126 = memref.load %arg2[%c31] : memref<36xf32, #tpu.memory_space<smem>>
    %127 = vector.broadcast %126 : f32 to vector<1x128xf32>
    %128 = arith.mulf %4, %127 : vector<1x128xf32>
    %129 = arith.addf %125, %128 : vector<1x128xf32>
    %c4_14 = arith.constant 4 : index
    %130 = memref.load %arg3[%c4_14] : memref<9xf32, #tpu.memory_space<smem>>
    %131 = vector.broadcast %130 : f32 to vector<1x128xf32>
    %132 = arith.addf %129, %131 : vector<1x128xf32>
    %cst_15 = arith.constant 0.000000e+00 : f32
    %133 = vector.broadcast %cst_15 : f32 to vector<1x128xf32>
    %134 = arith.maximumf %132, %133 : vector<1x128xf32>
    %c8 = arith.constant 8 : index
    %135 = memref.load %arg4[%c8] : memref<18xf32, #tpu.memory_space<smem>>
    %136 = vector.broadcast %135 : f32 to vector<1x128xf32>
    %137 = arith.mulf %134, %136 : vector<1x128xf32>
    %138 = arith.addf %110, %137 : vector<1x128xf32>
    %c9_16 = arith.constant 9 : index
    %139 = memref.load %arg4[%c9_16] : memref<18xf32, #tpu.memory_space<smem>>
    %140 = vector.broadcast %139 : f32 to vector<1x128xf32>
    %141 = arith.mulf %134, %140 : vector<1x128xf32>
    %142 = arith.addf %114, %141 : vector<1x128xf32>
    %c5_17 = arith.constant 5 : index
    %143 = memref.load %arg2[%c5_17] : memref<36xf32, #tpu.memory_space<smem>>
    %144 = vector.broadcast %143 : f32 to vector<1x128xf32>
    %145 = arith.mulf %1, %144 : vector<1x128xf32>
    %c14 = arith.constant 14 : index
    %146 = memref.load %arg2[%c14] : memref<36xf32, #tpu.memory_space<smem>>
    %147 = vector.broadcast %146 : f32 to vector<1x128xf32>
    %148 = arith.mulf %2, %147 : vector<1x128xf32>
    %149 = arith.addf %145, %148 : vector<1x128xf32>
    %c23 = arith.constant 23 : index
    %150 = memref.load %arg2[%c23] : memref<36xf32, #tpu.memory_space<smem>>
    %151 = vector.broadcast %150 : f32 to vector<1x128xf32>
    %152 = arith.mulf %3, %151 : vector<1x128xf32>
    %153 = arith.addf %149, %152 : vector<1x128xf32>
    %c32 = arith.constant 32 : index
    %154 = memref.load %arg2[%c32] : memref<36xf32, #tpu.memory_space<smem>>
    %155 = vector.broadcast %154 : f32 to vector<1x128xf32>
    %156 = arith.mulf %4, %155 : vector<1x128xf32>
    %157 = arith.addf %153, %156 : vector<1x128xf32>
    %c5_18 = arith.constant 5 : index
    %158 = memref.load %arg3[%c5_18] : memref<9xf32, #tpu.memory_space<smem>>
    %159 = vector.broadcast %158 : f32 to vector<1x128xf32>
    %160 = arith.addf %157, %159 : vector<1x128xf32>
    %cst_19 = arith.constant 0.000000e+00 : f32
    %161 = vector.broadcast %cst_19 : f32 to vector<1x128xf32>
    %162 = arith.maximumf %160, %161 : vector<1x128xf32>
    %c10_20 = arith.constant 10 : index
    %163 = memref.load %arg4[%c10_20] : memref<18xf32, #tpu.memory_space<smem>>
    %164 = vector.broadcast %163 : f32 to vector<1x128xf32>
    %165 = arith.mulf %162, %164 : vector<1x128xf32>
    %166 = arith.addf %138, %165 : vector<1x128xf32>
    %c11_21 = arith.constant 11 : index
    %167 = memref.load %arg4[%c11_21] : memref<18xf32, #tpu.memory_space<smem>>
    %168 = vector.broadcast %167 : f32 to vector<1x128xf32>
    %169 = arith.mulf %162, %168 : vector<1x128xf32>
    %170 = arith.addf %142, %169 : vector<1x128xf32>
    %c6_22 = arith.constant 6 : index
    %171 = memref.load %arg2[%c6_22] : memref<36xf32, #tpu.memory_space<smem>>
    %172 = vector.broadcast %171 : f32 to vector<1x128xf32>
    %173 = arith.mulf %1, %172 : vector<1x128xf32>
    %c15 = arith.constant 15 : index
    %174 = memref.load %arg2[%c15] : memref<36xf32, #tpu.memory_space<smem>>
    %175 = vector.broadcast %174 : f32 to vector<1x128xf32>
    %176 = arith.mulf %2, %175 : vector<1x128xf32>
    %177 = arith.addf %173, %176 : vector<1x128xf32>
    %c24 = arith.constant 24 : index
    %178 = memref.load %arg2[%c24] : memref<36xf32, #tpu.memory_space<smem>>
    %179 = vector.broadcast %178 : f32 to vector<1x128xf32>
    %180 = arith.mulf %3, %179 : vector<1x128xf32>
    %181 = arith.addf %177, %180 : vector<1x128xf32>
    %c33 = arith.constant 33 : index
    %182 = memref.load %arg2[%c33] : memref<36xf32, #tpu.memory_space<smem>>
    %183 = vector.broadcast %182 : f32 to vector<1x128xf32>
    %184 = arith.mulf %4, %183 : vector<1x128xf32>
    %185 = arith.addf %181, %184 : vector<1x128xf32>
    %c6_23 = arith.constant 6 : index
    %186 = memref.load %arg3[%c6_23] : memref<9xf32, #tpu.memory_space<smem>>
    %187 = vector.broadcast %186 : f32 to vector<1x128xf32>
    %188 = arith.addf %185, %187 : vector<1x128xf32>
    %cst_24 = arith.constant 0.000000e+00 : f32
    %189 = vector.broadcast %cst_24 : f32 to vector<1x128xf32>
    %190 = arith.maximumf %188, %189 : vector<1x128xf32>
    %c12_25 = arith.constant 12 : index
    %191 = memref.load %arg4[%c12_25] : memref<18xf32, #tpu.memory_space<smem>>
    %192 = vector.broadcast %191 : f32 to vector<1x128xf32>
    %193 = arith.mulf %190, %192 : vector<1x128xf32>
    %194 = arith.addf %166, %193 : vector<1x128xf32>
    %c13_26 = arith.constant 13 : index
    %195 = memref.load %arg4[%c13_26] : memref<18xf32, #tpu.memory_space<smem>>
    %196 = vector.broadcast %195 : f32 to vector<1x128xf32>
    %197 = arith.mulf %190, %196 : vector<1x128xf32>
    %198 = arith.addf %170, %197 : vector<1x128xf32>
    %c7_27 = arith.constant 7 : index
    %199 = memref.load %arg2[%c7_27] : memref<36xf32, #tpu.memory_space<smem>>
    %200 = vector.broadcast %199 : f32 to vector<1x128xf32>
    %201 = arith.mulf %1, %200 : vector<1x128xf32>
    %c16 = arith.constant 16 : index
    %202 = memref.load %arg2[%c16] : memref<36xf32, #tpu.memory_space<smem>>
    %203 = vector.broadcast %202 : f32 to vector<1x128xf32>
    %204 = arith.mulf %2, %203 : vector<1x128xf32>
    %205 = arith.addf %201, %204 : vector<1x128xf32>
    %c25 = arith.constant 25 : index
    %206 = memref.load %arg2[%c25] : memref<36xf32, #tpu.memory_space<smem>>
    %207 = vector.broadcast %206 : f32 to vector<1x128xf32>
    %208 = arith.mulf %3, %207 : vector<1x128xf32>
    %209 = arith.addf %205, %208 : vector<1x128xf32>
    %c34 = arith.constant 34 : index
    %210 = memref.load %arg2[%c34] : memref<36xf32, #tpu.memory_space<smem>>
    %211 = vector.broadcast %210 : f32 to vector<1x128xf32>
    %212 = arith.mulf %4, %211 : vector<1x128xf32>
    %213 = arith.addf %209, %212 : vector<1x128xf32>
    %c7_28 = arith.constant 7 : index
    %214 = memref.load %arg3[%c7_28] : memref<9xf32, #tpu.memory_space<smem>>
    %215 = vector.broadcast %214 : f32 to vector<1x128xf32>
    %216 = arith.addf %213, %215 : vector<1x128xf32>
    %cst_29 = arith.constant 0.000000e+00 : f32
    %217 = vector.broadcast %cst_29 : f32 to vector<1x128xf32>
    %218 = arith.maximumf %216, %217 : vector<1x128xf32>
    %c14_30 = arith.constant 14 : index
    %219 = memref.load %arg4[%c14_30] : memref<18xf32, #tpu.memory_space<smem>>
    %220 = vector.broadcast %219 : f32 to vector<1x128xf32>
    %221 = arith.mulf %218, %220 : vector<1x128xf32>
    %222 = arith.addf %194, %221 : vector<1x128xf32>
    %c15_31 = arith.constant 15 : index
    %223 = memref.load %arg4[%c15_31] : memref<18xf32, #tpu.memory_space<smem>>
    %224 = vector.broadcast %223 : f32 to vector<1x128xf32>
    %225 = arith.mulf %218, %224 : vector<1x128xf32>
    %226 = arith.addf %198, %225 : vector<1x128xf32>
    %c8_32 = arith.constant 8 : index
    %227 = memref.load %arg2[%c8_32] : memref<36xf32, #tpu.memory_space<smem>>
    %228 = vector.broadcast %227 : f32 to vector<1x128xf32>
    %229 = arith.mulf %1, %228 : vector<1x128xf32>
    %c17 = arith.constant 17 : index
    %230 = memref.load %arg2[%c17] : memref<36xf32, #tpu.memory_space<smem>>
    %231 = vector.broadcast %230 : f32 to vector<1x128xf32>
    %232 = arith.mulf %2, %231 : vector<1x128xf32>
    %233 = arith.addf %229, %232 : vector<1x128xf32>
    %c26 = arith.constant 26 : index
    %234 = memref.load %arg2[%c26] : memref<36xf32, #tpu.memory_space<smem>>
    %235 = vector.broadcast %234 : f32 to vector<1x128xf32>
    %236 = arith.mulf %3, %235 : vector<1x128xf32>
    %237 = arith.addf %233, %236 : vector<1x128xf32>
    %c35 = arith.constant 35 : index
    %238 = memref.load %arg2[%c35] : memref<36xf32, #tpu.memory_space<smem>>
    %239 = vector.broadcast %238 : f32 to vector<1x128xf32>
    %240 = arith.mulf %4, %239 : vector<1x128xf32>
    %241 = arith.addf %237, %240 : vector<1x128xf32>
    %c8_33 = arith.constant 8 : index
    %242 = memref.load %arg3[%c8_33] : memref<9xf32, #tpu.memory_space<smem>>
    %243 = vector.broadcast %242 : f32 to vector<1x128xf32>
    %244 = arith.addf %241, %243 : vector<1x128xf32>
    %cst_34 = arith.constant 0.000000e+00 : f32
    %245 = vector.broadcast %cst_34 : f32 to vector<1x128xf32>
    %246 = arith.maximumf %244, %245 : vector<1x128xf32>
    %c16_35 = arith.constant 16 : index
    %247 = memref.load %arg4[%c16_35] : memref<18xf32, #tpu.memory_space<smem>>
    %248 = vector.broadcast %247 : f32 to vector<1x128xf32>
    %249 = arith.mulf %246, %248 : vector<1x128xf32>
    %250 = arith.addf %222, %249 : vector<1x128xf32>
    %c17_36 = arith.constant 17 : index
    %251 = memref.load %arg4[%c17_36] : memref<18xf32, #tpu.memory_space<smem>>
    %252 = vector.broadcast %251 : f32 to vector<1x128xf32>
    %253 = arith.mulf %246, %252 : vector<1x128xf32>
    %254 = arith.addf %226, %253 : vector<1x128xf32>
    %c0_37 = arith.constant 0 : index
    %255 = memref.load %arg5[%c0_37] : memref<2xf32, #tpu.memory_space<smem>>
    %256 = vector.broadcast %255 : f32 to vector<1x128xf32>
    %257 = arith.addf %250, %256 : vector<1x128xf32>
    %c0_38 = arith.constant 0 : index
    %c0_39 = arith.constant 0 : index
    %258 = vector.load %arg6[%c0_38, %c0_39] : memref<2x128xf32, #tpu.memory_space<vmem>>, vector<1x128xf32>
    tpu.vector_store %arg6[%c0_38, %c0_39], %257 {strides = array<i32>} : memref<2x128xf32, #tpu.memory_space<vmem>>, vector<1x128xf32>,
    %c1_40 = arith.constant 1 : index
    %259 = memref.load %arg5[%c1_40] : memref<2xf32, #tpu.memory_space<smem>>
    %260 = vector.broadcast %259 : f32 to vector<1x128xf32>
    %261 = arith.addf %254, %260 : vector<1x128xf32>
    %c1_41 = arith.constant 1 : index
    %c0_42 = arith.constant 0 : index
    %262 = vector.load %arg6[%c1_41, %c0_42] : memref<2x128xf32, #tpu.memory_space<vmem>>, vector<1x128xf32>
    tpu.vector_store %arg6[%c1_41, %c0_42], %261 {strides = array<i32>} : memref<2x128xf32, #tpu.memory_space<vmem>>, vector<1x128xf32>,
    return
  }
  func.func @transform_0(%arg0: i32) -> (i32, i32) {
    %c0_i32 = arith.constant 0 : i32
    %c0_i32_0 = arith.constant 0 : i32
    return %c0_i32, %arg0 : i32, i32
  }
  func.func @transform_1(%arg0: i32) -> i32 {
    %c0_i32 = arith.constant 0 : i32
    %c0_i32_0 = arith.constant 0 : i32
    return %c0_i32 : i32
  }
  func.func @transform_2(%arg0: i32) -> i32 {
    %c0_i32 = arith.constant 0 : i32
    %c0_i32_0 = arith.constant 0 : i32
    return %c0_i32 : i32
  }
  func.func @transform_3(%arg0: i32) -> i32 {
    %c0_i32 = arith.constant 0 : i32
    %c0_i32_0 = arith.constant 0 : i32
    return %c0_i32 : i32
  }
  func.func @transform_4(%arg0: i32) -> i32 {
    %c0_i32 = arith.constant 0 : i32
    %c0_i32_0 = arith.constant 0 : i32
    return %c0_i32 : i32
  }
  func.func @transform_5(%arg0: i32) -> (i32, i32) {
    %c0_i32 = arith.constant 0 : i32
    %c0_i32_0 = arith.constant 0 : i32
    return %c0_i32, %arg0 : i32, i32
  }
}

</mosaic_0001>

<llo_original>
// kernel: tpu_custom_call.1
$region0: #{tpu_custom_call.1}
  #allocation0 [shape = 'u32[]', space=smem, size = 0x4, offset = 0x4, fixed_abs, tag = 'smem constant byte address 0x4 - core index']
  #allocation1 [shape = 'u32[144,128]{1,0:T(1,128)}', space=vmem, size = 0x12000, scoped, tag = 'internal scratch']
  %s0 = inlined_call_operand.hbm [shape: f32[4,128], index: 0, kind: input, shape index: {}]
  %s1 = inlined_call_operand.vmem [shape: f32[36], index: 1, kind: input, shape index: {}]
  %s2 = inlined_call_operand.vmem [shape: f32[9], index: 2, kind: input, shape index: {}]
  %s3 = inlined_call_operand.vmem [shape: f32[18], index: 3, kind: input, shape index: {}]
  %s4 = inlined_call_operand.vmem [shape: f32[2], index: 4, kind: input, shape index: {}]
  %s5 = inlined_call_operand.hbm [shape: f32[2,128], index: 5, kind: output, shape index: {}]
  %s6 = sld [smem:[#allocation0]]
  $region50: #{tpu_custom_call.1} parent=0
    _
  %s8 = ssub.s32 1, %s6
  %s9 = scalar_select 0, %s8, %s6
  $region1: #{tpu_custom_call.1} parent=0
    #allocation2 [shape = 'u8[2048]{0}', space=vmem, size = 0x800, scoped, tag = 'input window, operand 0, single buffered']
    #allocation3 [shape = 's32[1]{0}', space=sflag, size = 0x4, scoped, tag = 'scoped memory for tpu_custom_call.1']
    #allocation4 [shape = 's32[1]{0}', space=sflag, size = 0x4, scoped, tag = 'scoped memory for tpu_custom_call.1']
    #allocation5 [shape = 's32[1]{0}', space=sflag, size = 0x4, scoped, tag = 'scoped memory for tpu_custom_call.1']
    #allocation6 [shape = 'u8[512]{0}', space=smem, size = 0x200, scoped, tag = 'input window, operand 1, single buffered']
    #allocation7 [shape = 'u8[512]{0}', space=smem, size = 0x200, scoped, tag = 'input window, operand 2, single buffered']
    #allocation8 [shape = 's32[1]{0}', space=sflag, size = 0x4, scoped, tag = 'scoped memory for tpu_custom_call.1']
    #allocation9 [shape = 'u8[512]{0}', space=smem, size = 0x200, scoped, tag = 'input window, operand 3, single buffered']
    #allocation10 [shape = 'u8[512]{0}', space=smem, size = 0x200, scoped, tag = 'input window, operand 4, single buffered']
    #allocation11 [shape = 's32[1]{0}', space=sflag, size = 0x4, scoped, tag = 'scoped memory for tpu_custom_call.1']
    #allocation12 [shape = 'u8[1024]{0}', space=vmem, size = 0x400, scoped, tag = 'output window, operand 0, single buffered']
    %10 = vsyncpa [#allocation3], 0
    %11 = vsyncpa [#allocation5], 0
    %12 = vsyncpa [#allocation8], 0
    %13 = vsyncpa [#allocation11], 0
    %14 = vsyncpa [#allocation4], 0
    // Predicated region
    $region2: #{tpu_custom_call.1} parent=1 // pred_check
      _
    $region3: #{tpu_custom_call.1} parent=1 // pred_check_branch
      %16 = sbr.rel (0) target = $region5
    $region4: #{tpu_custom_call.1} parent=1 // pred_region
      %s18 = ssub.s32 64, 64
      %19 = vsyncadd [#allocation3], %s18
      %s21 = sshll.u32 [#allocation2], 4
      %s22 = int_to_ptr.vmem [resolvable:$true] %s21
      %24 = dma.hbm_to_vmem [thread:$0]  %s0, 64, %s22, [#allocation3]
    $region5: #{tpu_custom_call.1} parent=1 // pred_fallthru
      _
    // Predicated region
    $region6: #{tpu_custom_call.1} parent=1 // pred_check
      _
    $region7: #{tpu_custom_call.1} parent=1 // pred_check_branch
      %26 = sbr.rel (0) target = $region9
    $region8: #{tpu_custom_call.1} parent=1 // pred_region
      %s28 = ssub.s32 16, 16
      %29 = vsyncadd [#allocation5], %s28
      %s31 = sshll.u32 %s1, 4
      %s32 = int_to_ptr.vmem [resolvable:$true] %s31
      %34 = dma.vmem_to_smem %s32, 16, [#allocation6], [#allocation5]
    $region9: #{tpu_custom_call.1} parent=1 // pred_fallthru
      _
    // Predicated region
    $region10: #{tpu_custom_call.1} parent=1 // pred_check
      _
    $region11: #{tpu_custom_call.1} parent=1 // pred_check_branch
      %36 = sbr.rel (0) target = $region13
    $region12: #{tpu_custom_call.1} parent=1 // pred_region
      %s38 = ssub.s32 16, 16
      %39 = vsyncadd [#allocation8], %s38
      %s41 = sshll.u32 %s2, 4
      %s42 = int_to_ptr.vmem [resolvable:$true] %s41
      %44 = dma.vmem_to_smem %s42, 16, [#allocation7], [#allocation8]
    $region13: #{tpu_custom_call.1} parent=1 // pred_fallthru
      _
    // Predicated region
    $region14: #{tpu_custom_call.1} parent=1 // pred_check
      _
    $region15: #{tpu_custom_call.1} parent=1 // pred_check_branch
      %46 = sbr.rel (0) target = $region17
    $region16: #{tpu_custom_call.1} parent=1 // pred_region
      %s48 = ssub.s32 16, 16
      %49 = vsyncadd [#allocation8], %s48
      %s51 = sshll.u32 %s3, 4
      %s52 = int_to_ptr.vmem [resolvable:$true] %s51
      %54 = dma.vmem_to_smem %s52, 16, [#allocation9], [#allocation8]
    $region17: #{tpu_custom_call.1} parent=1 // pred_fallthru
      _
    // Predicated region
    $region18: #{tpu_custom_call.1} parent=1 // pred_check
      _
    $region19: #{tpu_custom_call.1} parent=1 // pred_check_branch
      %56 = sbr.rel (0) target = $region21
    $region20: #{tpu_custom_call.1} parent=1 // pred_region
      %s58 = ssub.s32 16, 16
      %59 = vsyncadd [#allocation11], %s58
      %s61 = sshll.u32 %s4, 4
      %s62 = int_to_ptr.vmem [resolvable:$true] %s61
      %64 = dma.vmem_to_smem %s62, 16, [#allocation10], [#allocation11]
    $region21: #{tpu_custom_call.1} parent=1 // pred_fallthru
      _
    // Predicated region
    $region22: #{tpu_custom_call.1} parent=1 // pred_check
      _
    $region23: #{tpu_custom_call.1} parent=1 // pred_check_branch
      %66 = sbr.rel (0) target = $region25
    $region24: #{tpu_custom_call.1} parent=1 // pred_region
      %67 = dma.done [#allocation3], 64
    $region25: #{tpu_custom_call.1} parent=1 // pred_fallthru
      _
    // Predicated region
    $region26: #{tpu_custom_call.1} parent=1 // pred_check
      _
    $region27: #{tpu_custom_call.1} parent=1 // pred_check_branch
      %69 = sbr.rel (0) target = $region29
    $region28: #{tpu_custom_call.1} parent=1 // pred_region
      %70 = dma.done [#allocation5], 16
    $region29: #{tpu_custom_call.1} parent=1 // pred_fallthru
      _
    // Predicated region
    $region30: #{tpu_custom_call.1} parent=1 // pred_check
      _
    $region31: #{tpu_custom_call.1} parent=1 // pred_check_branch
      %72 = sbr.rel (0) target = $region33
    $region32: #{tpu_custom_call.1} parent=1 // pred_region
      %73 = dma.done [#allocation8], 16
    $region33: #{tpu_custom_call.1} parent=1 // pred_fallthru
      _
    // Predicated region
    $region34: #{tpu_custom_call.1} parent=1 // pred_check
      _
    $region35: #{tpu_custom_call.1} parent=1 // pred_check_branch
      %75 = sbr.rel (0) target = $region37
    $region36: #{tpu_custom_call.1} parent=1 // pred_region
      %76 = dma.done [#allocation8], 16
    $region37: #{tpu_custom_call.1} parent=1 // pred_fallthru
      _
    // Predicated region
    $region38: #{tpu_custom_call.1} parent=1 // pred_check
      _
    $region39: #{tpu_custom_call.1} parent=1 // pred_check_branch
      %78 = sbr.rel (0) target = $region41
    $region40: #{tpu_custom_call.1} parent=1 // pred_region
      %79 = dma.done [#allocation11], 16
    $region41: #{tpu_custom_call.1} parent=1 // pred_fallthru
      _
    %80 = sfence
    %v81 = vld [vmem:[#allocation2] sm:$0xf]
    %s82 = sld [smem:[#allocation6]]
    %v83 = vstv %s82
    %v84 = vmul.f32 %v81, %v83
    %s85 = sld [smem:[#allocation6 + $0x9]]
    %v86 = vstv %s85
    %v87 = vmul.f32 %v81, %v86
    %v89 = vrot.slane %v87, 1
    %v91 = vadd.f32 %v84, %v89
    %s92 = sld [smem:[#allocation6 + $0x12]]
    %v93 = vstv %s92
    %v94 = vmul.f32 %v81, %v93
    %v96 = vrot.slane %v94, 2
    %v98 = vadd.f32 %v91, %v96
    %s99 = sld [smem:[#allocation6 + $0x1b]]
    %v100 = vstv %s99
    %v101 = vmul.f32 %v81, %v100
    %v103 = vrot.slane %v101, 3
    %v105 = vadd.f32 %v98, %v103
    %s106 = sld [smem:[#allocation7]]
    %v107 = vstv %s106
    %v108 = vadd.f32 %v105, %v107
    %v109 = vmax.f32 %v108, 0.0
    %s110 = sld [smem:[#allocation9]]
    %v111 = vstv %s110
    %v112 = vmul.f32 %v109, %v111
    %s113 = sld [smem:[#allocation9 + $0x1]]
    %v114 = vstv %s113
    %v115 = vmul.f32 %v109, %v114
    %s116 = sld [smem:[#allocation6 + $0x1]]
    %v117 = vstv %s116
    %v118 = vmul.f32 %v81, %v117
    %s119 = sld [smem:[#allocation6 + $0xa]]
    %v120 = vstv %s119
    %v121 = vmul.f32 %v81, %v120
    %v123 = vrot.slane %v121, 1
    %v125 = vadd.f32 %v118, %v123
    %s126 = sld [smem:[#allocation6 + $0x13]]
    %v127 = vstv %s126
    %v128 = vmul.f32 %v81, %v127
    %v130 = vrot.slane %v128, 2
    %v132 = vadd.f32 %v125, %v130
    %s133 = sld [smem:[#allocation6 + $0x1c]]
    %v134 = vstv %s133
    %v135 = vmul.f32 %v81, %v134
    %v137 = vrot.slane %v135, 3
    %v139 = vadd.f32 %v132, %v137
    %s140 = sld [smem:[#allocation7 + $0x1]]
    %v141 = vstv %s140
    %v142 = vadd.f32 %v139, %v141
    %v143 = vmax.f32 %v142, 0.0
    %s144 = sld [smem:[#allocation9 + $0x2]]
    %v145 = vstv %s144
    %v146 = vmul.f32 %v143, %v145
    %v147 = vadd.f32 %v112, %v146
    %s148 = sld [smem:[#allocation9 + $0x3]]
    %v149 = vstv %s148
    %v150 = vmul.f32 %v143, %v149
    %v151 = vadd.f32 %v115, %v150
    %s152 = sld [smem:[#allocation6 + $0x2]]
    %v153 = vstv %s152
    %v154 = vmul.f32 %v81, %v153
    %s155 = sld [smem:[#allocation6 + $0xb]]
    %v156 = vstv %s155
    %v157 = vmul.f32 %v81, %v156
    %v159 = vrot.slane %v157, 1
    %v161 = vadd.f32 %v154, %v159
    %s162 = sld [smem:[#allocation6 + $0x14]]
    %v163 = vstv %s162
    %v164 = vmul.f32 %v81, %v163
    %v166 = vrot.slane %v164, 2
    %v168 = vadd.f32 %v161, %v166
    %s169 = sld [smem:[#allocation6 + $0x1d]]
    %v170 = vstv %s169
    %v171 = vmul.f32 %v81, %v170
    %v173 = vrot.slane %v171, 3
    %v175 = vadd.f32 %v168, %v173
    %s176 = sld [smem:[#allocation7 + $0x2]]
    %v177 = vstv %s176
    %v178 = vadd.f32 %v175, %v177
    %v179 = vmax.f32 %v178, 0.0
    %s180 = sld [smem:[#allocation9 + $0x4]]
    %v181 = vstv %s180
    %v182 = vmul.f32 %v179, %v181
    %v183 = vadd.f32 %v147, %v182
    %s184 = sld [smem:[#allocation9 + $0x5]]
    %v185 = vstv %s184
    %v186 = vmul.f32 %v179, %v185
    %v187 = vadd.f32 %v151, %v186
    %s188 = sld [smem:[#allocation6 + $0x3]]
    %v189 = vstv %s188
    %v190 = vmul.f32 %v81, %v189
    %s191 = sld [smem:[#allocation6 + $0xc]]
    %v192 = vstv %s191
    %v193 = vmul.f32 %v81, %v192
    %v195 = vrot.slane %v193, 1
    %v197 = vadd.f32 %v190, %v195
    %s198 = sld [smem:[#allocation6 + $0x15]]
    %v199 = vstv %s198
    %v200 = vmul.f32 %v81, %v199
    %v202 = vrot.slane %v200, 2
    %v204 = vadd.f32 %v197, %v202
    %s205 = sld [smem:[#allocation6 + $0x1e]]
    %v206 = vstv %s205
    %v207 = vmul.f32 %v81, %v206
    %v209 = vrot.slane %v207, 3
    %v211 = vadd.f32 %v204, %v209
    %s212 = sld [smem:[#allocation7 + $0x3]]
    %v213 = vstv %s212
    %v214 = vadd.f32 %v211, %v213
    %v215 = vmax.f32 %v214, 0.0
    %s216 = sld [smem:[#allocation9 + $0x6]]
    %v217 = vstv %s216
    %v218 = vmul.f32 %v215, %v217
    %v219 = vadd.f32 %v183, %v218
    %s220 = sld [smem:[#allocation9 + $0x7]]
    %v221 = vstv %s220
    %v222 = vmul.f32 %v215, %v221
    %v223 = vadd.f32 %v187, %v222
    %s224 = sld [smem:[#allocation6 + $0x4]]
    %v225 = vstv %s224
    %v226 = vmul.f32 %v81, %v225
    %s227 = sld [smem:[#allocation6 + $0xd]]
    %v228 = vstv %s227
    %v229 = vmul.f32 %v81, %v228
    %v231 = vrot.slane %v229, 1
    %v233 = vadd.f32 %v226, %v231
    %s234 = sld [smem:[#allocation6 + $0x16]]
    %v235 = vstv %s234
    %v236 = vmul.f32 %v81, %v235
    %v238 = vrot.slane %v236, 2
    %v240 = vadd.f32 %v233, %v238
    %s241 = sld [smem:[#allocation6 + $0x1f]]
    %v242 = vstv %s241
    %v243 = vmul.f32 %v81, %v242
    %v245 = vrot.slane %v243, 3
    %v247 = vadd.f32 %v240, %v245
    %s248 = sld [smem:[#allocation7 + $0x4]]
    %v249 = vstv %s248
    %v250 = vadd.f32 %v247, %v249
    %v251 = vmax.f32 %v250, 0.0
    %s252 = sld [smem:[#allocation9 + $0x8]]
    %v253 = vstv %s252
    %v254 = vmul.f32 %v251, %v253
    %v255 = vadd.f32 %v219, %v254
    %s256 = sld [smem:[#allocation9 + $0x9]]
    %v257 = vstv %s256
    %v258 = vmul.f32 %v251, %v257
    %v259 = vadd.f32 %v223, %v258
    %s260 = sld [smem:[#allocation6 + $0x5]]
    %v261 = vstv %s260
    %v262 = vmul.f32 %v81, %v261
    %s263 = sld [smem:[#allocation6 + $0xe]]
    %v264 = vstv %s263
    %v265 = vmul.f32 %v81, %v264
    %v267 = vrot.slane %v265, 1
    %v269 = vadd.f32 %v262, %v267
    %s270 = sld [smem:[#allocation6 + $0x17]]
    %v271 = vstv %s270
    %v272 = vmul.f32 %v81, %v271
    %v274 = vrot.slane %v272, 2
    %v276 = vadd.f32 %v269, %v274
    %s277 = sld [smem:[#allocation6 + $0x20]]
    %v278 = vstv %s277
    %v279 = vmul.f32 %v81, %v278
    %v281 = vrot.slane %v279, 3
    %v283 = vadd.f32 %v276, %v281
    %s284 = sld [smem:[#allocation7 + $0x5]]
    %v285 = vstv %s284
    %v286 = vadd.f32 %v283, %v285
    %v287 = vmax.f32 %v286, 0.0
    %s288 = sld [smem:[#allocation9 + $0xa]]
    %v289 = vstv %s288
    %v290 = vmul.f32 %v287, %v289
    %v291 = vadd.f32 %v255, %v290
    %s292 = sld [smem:[#allocation9 + $0xb]]
    %v293 = vstv %s292
    %v294 = vmul.f32 %v287, %v293
    %v295 = vadd.f32 %v259, %v294
    %s296 = sld [smem:[#allocation6 + $0x6]]
    %v297 = vstv %s296
    %v298 = vmul.f32 %v81, %v297
    %s299 = sld [smem:[#allocation6 + $0xf]]
    %v300 = vstv %s299
    %v301 = vmul.f32 %v81, %v300
    %v303 = vrot.slane %v301, 1
    %v305 = vadd.f32 %v298, %v303
    %s306 = sld [smem:[#allocation6 + $0x18]]
    %v307 = vstv %s306
    %v308 = vmul.f32 %v81, %v307
    %v310 = vrot.slane %v308, 2
    %v312 = vadd.f32 %v305, %v310
    %s313 = sld [smem:[#allocation6 + $0x21]]
    %v314 = vstv %s313
    %v315 = vmul.f32 %v81, %v314
    %v317 = vrot.slane %v315, 3
    %v319 = vadd.f32 %v312, %v317
    %s320 = sld [smem:[#allocation7 + $0x6]]
    %v321 = vstv %s320
    %v322 = vadd.f32 %v319, %v321
    %v323 = vmax.f32 %v322, 0.0
    %s324 = sld [smem:[#allocation9 + $0xc]]
    %v325 = vstv %s324
    %v326 = vmul.f32 %v323, %v325
    %v327 = vadd.f32 %v291, %v326
    %s328 = sld [smem:[#allocation9 + $0xd]]
    %v329 = vstv %s328
    %v330 = vmul.f32 %v323, %v329
    %v331 = vadd.f32 %v295, %v330
    %s332 = sld [smem:[#allocation6 + $0x7]]
    %v333 = vstv %s332
    %v334 = vmul.f32 %v81, %v333
    %s335 = sld [smem:[#allocation6 + $0x10]]
    %v336 = vstv %s335
    %v337 = vmul.f32 %v81, %v336
    %v339 = vrot.slane %v337, 1
    %v341 = vadd.f32 %v334, %v339
    %s342 = sld [smem:[#allocation6 + $0x19]]
    %v343 = vstv %s342
    %v344 = vmul.f32 %v81, %v343
    %v346 = vrot.slane %v344, 2
    %v348 = vadd.f32 %v341, %v346
    %s349 = sld [smem:[#allocation6 + $0x22]]
    %v350 = vstv %s349
    %v351 = vmul.f32 %v81, %v350
    %v353 = vrot.slane %v351, 3
    %v355 = vadd.f32 %v348, %v353
    %s356 = sld [smem:[#allocation7 + $0x7]]
    %v357 = vstv %s356
    %v358 = vadd.f32 %v355, %v357
    %v359 = vmax.f32 %v358, 0.0
    %s360 = sld [smem:[#allocation9 + $0xe]]
    %v361 = vstv %s360
    %v362 = vmul.f32 %v359, %v361
    %v363 = vadd.f32 %v327, %v362
    %s364 = sld [smem:[#allocation9 + $0xf]]
    %v365 = vstv %s364
    %v366 = vmul.f32 %v359, %v365
    %v367 = vadd.f32 %v331, %v366
    %s368 = sld [smem:[#allocation6 + $0x8]]
    %v369 = vstv %s368
    %v370 = vmul.f32 %v81, %v369
    %s371 = sld [smem:[#allocation6 + $0x11]]
    %v372 = vstv %s371
    %v373 = vmul.f32 %v81, %v372
    %v375 = vrot.slane %v373, 1
    %v377 = vadd.f32 %v370, %v375
    %s378 = sld [smem:[#allocation6 + $0x1a]]
    %v379 = vstv %s378
    %v380 = vmul.f32 %v81, %v379
    %v382 = vrot.slane %v380, 2
    %v384 = vadd.f32 %v377, %v382
    %s385 = sld [smem:[#allocation6 + $0x23]]
    %v386 = vstv %s385
    %v387 = vmul.f32 %v81, %v386
    %v389 = vrot.slane %v387, 3
    %v391 = vadd.f32 %v384, %v389
    %s392 = sld [smem:[#allocation7 + $0x8]]
    %v393 = vstv %s392
    %v394 = vadd.f32 %v391, %v393
    %v395 = vmax.f32 %v394, 0.0
    %s396 = sld [smem:[#allocation9 + $0x10]]
    %v397 = vstv %s396
    %v398 = vmul.f32 %v395, %v397
    %v399 = vadd.f32 %v363, %v398
    %s400 = sld [smem:[#allocation9 + $0x11]]
    %v401 = vstv %s400
    %v402 = vmul.f32 %v395, %v401
    %v403 = vadd.f32 %v367, %v402
    %s404 = sld [smem:[#allocation10]]
    %v405 = vstv %s404
    %v406 = vadd.f32 %v399, %v405
    %407 = vst [vmem:[#allocation12] sm:$0x1] %v406
    %s408 = sld [smem:[#allocation10 + $0x1]]
    %v409 = vstv %s408
    %v410 = vadd.f32 %v403, %v409
    %411 = vst [vmem:[#allocation12 + $0x1] sm:$0x1] %v410
    // Predicated region
    $region42: #{tpu_custom_call.1} parent=1 // pred_check
      _
    $region43: #{tpu_custom_call.1} parent=1 // pred_check_branch
      %413 = sbr.rel (0) target = $region45
    $region44: #{tpu_custom_call.1} parent=1 // pred_region
      %s415 = ssub.s32 32, 32
      %416 = vsyncadd [#allocation4], %s415
      %s418 = sshll.u32 [#allocation12], 4
      %s419 = int_to_ptr.vmem [resolvable:$true] %s418
      %421 = dma.vmem_to_hbm [thread:$0]  %s419, 32, %s5, [#allocation4]
    $region45: #{tpu_custom_call.1} parent=1 // pred_fallthru
      _
    // Predicated region
    $region46: #{tpu_custom_call.1} parent=1 // pred_check
      _
    $region47: #{tpu_custom_call.1} parent=1 // pred_check_branch
      %423 = sbr.rel (0) target = $region49
    $region48: #{tpu_custom_call.1} parent=1 // pred_region
      %424 = dma.done [#allocation4], 32
    $region49: #{tpu_custom_call.1} parent=1 // pred_fallthru
      _
    %425 = vsyncpa [#allocation3], 1
    %426 = vsyncpa [#allocation4], 1
    %427 = vsyncpa [#allocation5], 1
    %428 = vsyncpa [#allocation8], 1
    %429 = vsyncpa [#allocation11], 1

</llo_original>
